<compile_context>
chip_gen: v7x
topology: tpu7x:2x2x1
jax: 0.10.0
libtpu: 0.0.40
codegen_flags: <defaults>
</compile_context>

<pallas_src>
import functools

import jax
import jax.numpy as jnp
from jax.experimental import pallas as pl
from jax.experimental.pallas import tpu as pltpu


# ---------------------------------------------------------------------------
# Kernel 1: per-metapath semantic-attention score (sum over N; mean outside)
# ---------------------------------------------------------------------------
def _score_kernel(zp_ref, w_ref, b_ref, q_ref, s_ref, *, n_total, tile_n):
    n = pl.program_id(1)

    @pl.when(n == 0)
    def _():
        s_ref[...] = jnp.zeros_like(s_ref)

    z = zp_ref[0]                                                    # (TN, D)
    h = jnp.tanh(
        jnp.dot(z, w_ref[...], preferred_element_type=jnp.float32)   # MXU
        + b_ref[...])                                                # (TN, H)

    if n_total % tile_n != 0:                                        # mask OOB tail rows
        rows = n * tile_n + jax.lax.broadcasted_iota(jnp.int32, (tile_n, 1), 0)
        h = jnp.where(rows < n_total, h, 0.0)

    # Row-sum commutes with the linear projection onto q: sublane reduce (XLU)
    # plus a tiny VPU inner product instead of a width-1 MXU matmul.
    hsum = jnp.sum(h, axis=0, keepdims=True)                         # (1, H)
    s_ref[...] += jnp.sum(hsum * q_ref[...])


def metapath_scores(zp, w, b, q, *, tile_n=512):
    P, N, D = zp.shape
    H = w.shape[1]
    tn = N if N <= tile_n else tile_n
    n_tiles = pl.cdiv(N, tn)
    out = pl.pallas_call(
        functools.partial(_score_kernel, n_total=N, tile_n=tn),
        out_shape=jax.ShapeDtypeStruct((P, 1, 1), jnp.float32),
        grid_spec=pltpu.PrefetchScalarGridSpec(
            num_scalar_prefetch=0,
            grid=(P, n_tiles),
            in_specs=[
                pl.BlockSpec((1, tn, D), lambda p, n: (p, n, 0)),
                pl.BlockSpec((D, H), lambda p, n: (0, 0)),
                pl.BlockSpec((1, H), lambda p, n: (0, 0)),
                pl.BlockSpec((1, H), lambda p, n: (0, 0)),
            ],
            out_specs=pl.BlockSpec((1, 1, 1), lambda p, n: (p, 0, 0)),
        ),
        compiler_params=pltpu.CompilerParams(
            dimension_semantics=("parallel", "arbitrary")),
    )(zp, w, b.reshape(1, H), q.reshape(1, H))
    return out.reshape(P)  # sum over N (mean taken outside)


# ---------------------------------------------------------------------------
# Kernel 2: fuse the metapath tables once:  E = sum_p beta_p * Z_p
# beta (P,) lives in SMEM; the weighted sum runs on the VPU (P is tiny).
# ---------------------------------------------------------------------------
def _fuse_kernel(beta_ref, zp_ref, e_ref):
    num_p = zp_ref.shape[0]
    acc = beta_ref[0] * zp_ref[0]                                    # (TN, D)
    for p in range(1, num_p):                                        # static P loop
        acc = acc + beta_ref[p] * zp_ref[p]
    e_ref[...] = acc


def fuse_tables(beta, zp, *, tile_n=512):
    P, N, D = zp.shape
    tn = N if N <= tile_n else tile_n
    n_tiles = pl.cdiv(N, tn)
    return pl.pallas_call(
        _fuse_kernel,
        out_shape=jax.ShapeDtypeStruct((N, D), jnp.float32),
        grid_spec=pltpu.PrefetchScalarGridSpec(
            num_scalar_prefetch=0,
            grid=(n_tiles,),
            in_specs=[
                pl.BlockSpec(memory_space=pltpu.MemorySpace.SMEM),   # beta (P,)
                pl.BlockSpec((P, tn, D), lambda n: (0, n, 0)),
            ],
            out_specs=pl.BlockSpec((tn, D), lambda n: (n, 0)),
        ),
        compiler_params=pltpu.CompilerParams(
            dimension_semantics=("parallel",)),
    )(beta, zp)


# ---------------------------------------------------------------------------
# Kernel 3: batched embedding gather from the fused table.
# Indices are scalar-prefetched into SMEM; each grid step writes a dense
# (TILE_T, D) output block.
# ---------------------------------------------------------------------------
def _gather_kernel(idx_ref, e_ref, o_ref, *, tile_t):
    t = pl.program_id(0)
    base = t * tile_t

    def body(i, carry):
        row = idx_ref[base + i]
        o_ref[pl.ds(i, 1), :] = e_ref[pl.ds(row, 1), :]
        return carry

    jax.lax.fori_loop(0, tile_t, body, 0)


def gather_rows(e, flat_idx, *, tile_t=128):
    N, D = e.shape
    T = flat_idx.shape[0]
    tt = min(tile_t, ((T + 7) // 8) * 8)          # sublane-aligned token tile
    t_pad = ((T + tt - 1) // tt) * tt
    idx = jnp.pad(flat_idx.astype(jnp.int32), (0, t_pad - T))
    out = pl.pallas_call(
        functools.partial(_gather_kernel, tile_t=tt),
        out_shape=jax.ShapeDtypeStruct((t_pad, D), jnp.float32),
        grid_spec=pltpu.PrefetchScalarGridSpec(
            num_scalar_prefetch=1,
            grid=(t_pad // tt,),
            in_specs=[pl.BlockSpec((N, D), lambda t, idx: (0, 0))],  # full table, fetched once
            out_specs=pl.BlockSpec((tt, D), lambda t, idx: (t, 0)),
        ),
        compiler_params=pltpu.CompilerParams(
            dimension_semantics=("parallel",)),
    )(idx, e)
    return out[:T]


# ---------------------------------------------------------------------------
# PreEmb.forward (fusion == 'attnVec_nonLinear')
# ---------------------------------------------------------------------------
def pre_emb_forward(batch_ques, emb_tables, w, b, q):
    zp = emb_tables                                  # (P, N, D)
    P, N, D = zp.shape
    scores = metapath_scores(zp, w, b, q)            # (P,), sums over N
    beta = jax.nn.softmax(scores / N)                # mean + softmax (P scalars, glue)
    e = fuse_tables(beta, zp)                        # (N, D) fused table (one pass)
    flat_idx = batch_ques.reshape(-1).astype(jnp.int32)
    gathered = gather_rows(e, flat_idx)              # (B*S, D)
    return gathered.reshape(*batch_ques.shape, D)


def pre_emb_reference(batch_ques, zp, w, b, q):
    h = jnp.tanh(jnp.einsum('pnd,dh->pnh', zp, w) + b)
    scores = jnp.mean(jnp.einsum('pnh,h->pn', h, q), axis=1)
    beta = jax.nn.softmax(scores)
    whole = jnp.einsum('p,pnd->nd', beta, zp)
    return whole[batch_ques]


if __name__ == "__main__":
    P, N, D, H = 3, 64, 128, 128      # metapaths, num questions, emb_dim, attn hidden
    B, S = 2, 8                       # batch, seq

    key = jax.random.PRNGKey(0)
    k1, k2, k3, k4, k5 = jax.random.split(key, 5)
    emb_tables = jax.random.normal(k1, (P, N, D), jnp.float32)          # mp2quesEmbMat_dict
    w = jax.random.normal(k2, (D, H), jnp.float32) / jnp.sqrt(D)        # attn projection
    b = jax.random.normal(k3, (H,), jnp.float32) * 0.01                 # attn bias
    q = jax.random.normal(k4, (H,), jnp.float32) / jnp.sqrt(H)          # attn vector
    batch_ques = jax.random.randint(k5, (B, S), 0, N, jnp.int32)

    out = jax.block_until_ready(pre_emb_forward(batch_ques, emb_tables, w, b, q))
    ref = pre_emb_reference(batch_ques, emb_tables, w, b, q)

    assert out.shape == (B, S, D), out.shape
    assert jnp.allclose(out, ref, atol=1e-4, rtol=1e-4), float(jnp.max(jnp.abs(out - ref)))
    print("KERNEL_OK")
</pallas_src>

<mosaic_0001>
module attributes {stable_mosaic.version = 11 : i64} {
  func.func @_score_kernel(%arg0: i32, %arg1: i32, %arg2: memref<1x64x128xf32, #tpu.memory_space<vmem>>, %arg3: memref<128x128xf32, #tpu.memory_space<vmem>>, %arg4: memref<1x128xf32, #tpu.memory_space<vmem>>, %arg5: memref<1x128xf32, #tpu.memory_space<vmem>>, %arg6: memref<1x1x1xf32, #tpu.memory_space<vmem>>) attributes {dimension_semantics = [#tpu.dimension_semantics<parallel>, #tpu.dimension_semantics<arbitrary>], iteration_bounds = array<i64: 3, 1>, scalar_prefetch = 0 : i64, scratch_operands = 0 : i64, tpu.core_type = #tpu.core_type<tc>, window_params = [{transform_indices = @transform_0, window_bounds = array<i64: 1, 64, 128>}, {pipeline_mode = #tpu.pipeline_mode<synchronous>, transform_indices = @transform_1, window_bounds = array<i64: 128, 128>}, {pipeline_mode = #tpu.pipeline_mode<synchronous>, transform_indices = @transform_2, window_bounds = array<i64: 1, 128>}, {pipeline_mode = #tpu.pipeline_mode<synchronous>, transform_indices = @transform_3, window_bounds = array<i64: 1, 128>}, {transform_indices = @transform_4, window_bounds = array<i64: 1, 1, 1>}]} {
    %c0_i32 = arith.constant 0 : i32
    %0 = arith.cmpi eq, %arg1, %c0_i32 : i32
    %1 = arith.extui %0 : i1 to i32
    %c0_i32_0 = arith.constant 0 : i32
    %2 = arith.cmpi ne, %1, %c0_i32_0 : i32
    scf.if %2 {
      %cst_17 = arith.constant 0.000000e+00 : f32
      %23 = vector.broadcast %cst_17 : f32 to vector<1x1x1xf32>
      %c0_18 = arith.constant 0 : index
      %c0_19 = arith.constant 0 : index
      %c0_20 = arith.constant 0 : index
      %24 = vector.load %arg6[%c0_18, %c0_19, %c0_20] : memref<1x1x1xf32, #tpu.memory_space<vmem>>, vector<1x1x1xf32>
      tpu.vector_store %arg6[%c0_18, %c0_19, %c0_20], %23 {strides = array<i32>} : memref<1x1x1xf32, #tpu.memory_space<vmem>>, vector<1x1x1xf32>,
    } else {
    }
    %c0 = arith.constant 0 : index
    %c0_1 = arith.constant 0 : index
    %c0_2 = arith.constant 0 : index
    %3 = vector.load %arg2[%c0, %c0_1, %c0_2] : memref<1x64x128xf32, #tpu.memory_space<vmem>>, vector<1x64x128xf32>
    %4 = vector.shape_cast %3 : vector<1x64x128xf32> to vector<64x128xf32>
    %c0_3 = arith.constant 0 : index
    %c0_4 = arith.constant 0 : index
    %5 = vector.load %arg3[%c0_3, %c0_4] : memref<128x128xf32, #tpu.memory_space<vmem>>, vector<128x128xf32>
    %cst = arith.constant dense<0.000000e+00> : vector<64x128xf32>
    %6 = tpu.matmul %4, %5, %cst {dimension_numbers = #tpu.dot_dimension_numbers<[1], [0], [0], [1], [0, 0, 1, 1], [], []>} : vector<64x128xf32>, vector<128x128xf32>, vector<64x128xf32> -> vector<64x128xf32>
    %c0_5 = arith.constant 0 : index
    %c0_6 = arith.constant 0 : index
    %7 = vector.load %arg4[%c0_5, %c0_6] : memref<1x128xf32, #tpu.memory_space<vmem>>, vector<1x128xf32>
    %8 = vector.broadcast %7 : vector<1x128xf32> to vector<64x128xf32>
    %9 = arith.addf %6, %8 : vector<64x128xf32>
    %10 = math.tanh %9 : vector<64x128xf32>
    %cst_7 = arith.constant dense<0.000000e+00> : vector<128xf32>
    %11 = vector.multi_reduction <add>, %10, %cst_7 [0] : vector<64x128xf32> to vector<128xf32>
    %12 = vector.shape_cast %11 : vector<128xf32> to vector<1x128xf32>
    %c0_8 = arith.constant 0 : index
    %c0_9 = arith.constant 0 : index
    %c0_10 = arith.constant 0 : index
    %13 = vector.load %arg6[%c0_8, %c0_9, %c0_10] : memref<1x1x1xf32, #tpu.memory_space<vmem>>, vector<1x1x1xf32>
    %c0_11 = arith.constant 0 : index
    %c0_12 = arith.constant 0 : index
    %14 = vector.load %arg5[%c0_11, %c0_12] : memref<1x128xf32, #tpu.memory_space<vmem>>, vector<1x128xf32>
    %15 = arith.mulf %12, %14 : vector<1x128xf32>
    %16 = vector.shape_cast %15 : vector<1x128xf32> to vector<1x1x128xf32>
    %cst_13 = arith.constant dense<0.000000e+00> : vector<1xf32>
    %17 = vector.multi_reduction <add>, %16, %cst_13 [1, 2] : vector<1x1x128xf32> to vector<1xf32>
    %18 = vector.shape_cast %17 : vector<1xf32> to vector<1x1x1xf32>
    %19 = vector.extract %18[0, 0, 0] : f32 from vector<1x1x1xf32>
    %20 = vector.broadcast %19 : f32 to vector<1x1x1xf32>
    %21 = arith.addf %13, %20 : vector<1x1x1xf32>
    %c0_14 = arith.constant 0 : index
    %c0_15 = arith.constant 0 : index
    %c0_16 = arith.constant 0 : index
    %22 = vector.load %arg6[%c0_14, %c0_15, %c0_16] : memref<1x1x1xf32, #tpu.memory_space<vmem>>, vector<1x1x1xf32>
    tpu.vector_store %arg6[%c0_14, %c0_15, %c0_16], %21 {strides = array<i32>} : memref<1x1x1xf32, #tpu.memory_space<vmem>>, vector<1x1x1xf32>,
    return
  }
  func.func @transform_0(%arg0: i32, %arg1: i32) -> (i32, i32, i32) {
    %c0_i32 = arith.constant 0 : i32
    %c0_i32_0 = arith.constant 0 : i32
    return %arg0, %arg1, %c0_i32 : i32, i32, i32
  }
  func.func @transform_1(%arg0: i32, %arg1: i32) -> (i32, i32) {
    %c0_i32 = arith.constant 0 : i32
    %c0_i32_0 = arith.constant 0 : i32
    %c0_i32_1 = arith.constant 0 : i32
    return %c0_i32, %c0_i32_0 : i32, i32
  }
  func.func @transform_2(%arg0: i32, %arg1: i32) -> (i32, i32) {
    %c0_i32 = arith.constant 0 : i32
    %c0_i32_0 = arith.constant 0 : i32
    %c0_i32_1 = arith.constant 0 : i32
    return %c0_i32, %c0_i32_0 : i32, i32
  }
  func.func @transform_3(%arg0: i32, %arg1: i32) -> (i32, i32) {
    %c0_i32 = arith.constant 0 : i32
    %c0_i32_0 = arith.constant 0 : i32
    %c0_i32_1 = arith.constant 0 : i32
    return %c0_i32, %c0_i32_0 : i32, i32
  }
  func.func @transform_4(%arg0: i32, %arg1: i32) -> (i32, i32, i32) {
    %c0_i32 = arith.constant 0 : i32
    %c0_i32_0 = arith.constant 0 : i32
    %c0_i32_1 = arith.constant 0 : i32
    return %arg0, %c0_i32, %c0_i32_0 : i32, i32, i32
  }
}

</mosaic_0001>

<llo_original>
// kernel: tpu_custom_call.1
$region0: #{tpu_custom_call.1}
  #allocation0 [shape = 'u32[]', space=smem, size = 0x4, offset = 0x4, fixed_abs, tag = 'smem constant byte address 0x4 - core index']
  #allocation1 [shape = 'u32[144,128]{1,0:T(1,128)}', space=vmem, size = 0x12000, scoped, tag = 'internal scratch']
  %s0 = inlined_call_operand.hbm [shape: f32[3,64,128], index: 0, kind: input, shape index: {}]
  %s1 = inlined_call_operand.hbm [shape: f32[128,128], index: 1, kind: input, shape index: {}]
  %s2 = inlined_call_operand.vmem [shape: f32[1,128], index: 2, kind: input, shape index: {}]
  %s3 = inlined_call_operand.vmem [shape: f32[1,128], index: 3, kind: input, shape index: {}]
  %s4 = inlined_call_operand.vmem [shape: f32[3,1,1], index: 4, kind: output, shape index: {}]
  %s5 = sld [smem:[#allocation0]]
  $region61: #{tpu_custom_call.1} parent=0
    _
  %s7 = ssub.s32 1, %s5
  %s8 = scalar_select 0, %s7, %s5
  $region1: #{tpu_custom_call.1} parent=0
    #allocation2 [shape = 'u8[65536]{0}', space=vmem, size = 0x10000, scoped, tag = 'input window, operand 0']
    #allocation3 [shape = 's32[2]{0}', space=sflag, size = 0x8, scoped, tag = 'scoped memory for tpu_custom_call.1']
    #allocation4 [shape = 'u8[65536]{0}', space=vmem, size = 0x10000, scoped, tag = 'input window, operand 1, single buffered']
    #allocation5 [shape = 's32[1]{0}', space=sflag, size = 0x4, scoped, tag = 'scoped memory for tpu_custom_call.1']
    %9 = vsyncpa [#allocation3], 0
    %s10 = scalar_lea.sflag [#allocation3], 1
    %11 = vsyncpa %s10, 0
    %12 = vsyncpa [#allocation5], 0
    loop: start=0, step=1, limit=5
    $region2: #{tpu_custom_call.1} parent=1 // loop_pre_header
      _
    $region3: #{tpu_custom_call.1} parent=1 // loop_header
      %s14 = sphi 0, %s18
      %p15 = scmp.ge.s32.totalorder %s14, 5
      %s21 = sphi 0, %s33
      %s22 = sphi 0, %s29
      %s23 = sphi 0, %s21
      %s24 = sphi 0, %s22
      %s25 = sphi 0, %s23
      %s26 = sphi 0, %s24
      %s38 = sphi 0, %s40
      %s41 = sphi 0, %s38
      %s42 = sphi 0, %s41
      %s58 = sphi 0, %s42
      %s62 = sphi 0, %s62
      %s64 = sphi 0, %s62
      %s65 = sphi 0, %s64
      %s79 = sphi 0, %s65
      %s83 = sphi 0, %s83
      %s85 = sphi 0, %s83
      %s86 = sphi 0, %s85
      %s100 = sphi 0, %s86
      %s104 = sphi 0, %s104
      %s106 = sphi 0, %s104
      %s107 = sphi 0, %s106
      %s121 = sphi 0, %s107
      %s127 = sphi 0, %s129
      %s130 = sphi 0, %s127
      %s131 = sphi 0, %s130
      %s147 = sphi 0, %s131
    $region4: #{tpu_custom_call.1} parent=1 // loop_header_branch
      %17 = sbr.rel (%p15) target = $region8
    $region5: #{tpu_custom_call.1} parent=1 // loop_body
      %s19 = ssub.s32 %s14, 1
      %s20 = ssub.s32 %s14, 2
      %s27 = sadd.s32 1, %s22
      %p28 = scmp.ge.s32.totalorder %s27, 1
      %s29 = scalar_select %p28, 0, %s27
      %s30 = sadd.s32 1, %s21
      %s31 = scalar_select %p28, %s30, %s21
      %p32 = scmp.ge.s32.totalorder %s31, 3
      %s33 = scalar_select %p32, 0, %s31
      %s34 = ssub.s32 %s21, %s33
      %s35 = ssub.s32 %s22, %s29
      %s36 = sor.u32 %s34, %s35
      %p37 = scmp.eq.s32.totalorder %s36, 0
      %s39 = sadd.s32 %s38, 1
      %s40 = scalar_select %p37, %s38, %s39
      %p43 = pneg %p37
      %p44 = scmp.eq.s32.totalorder %s14, 2
      %p45 = por %p43, %p44
      %p46 = scmp.ne.s32.totalorder %s38, %s41
      %p47 = scmp.eq.s32.totalorder %s14, 0
      %p48 = por %p46, %p47
      %p49 = scmp.ne.s32.totalorder %s38, %s41
      %p50 = scmp.eq.s32.totalorder %s19, 2
      %p51 = por %p49, %p50
      %p52 = scmp.ne.s32.totalorder %s41, %s42
      %p53 = scmp.eq.s32.totalorder %s19, 0
      %p54 = por %p52, %p53
      %p55 = scmp.ne.s32.totalorder %s41, %s42
      %p56 = scmp.eq.s32.totalorder %s20, 2
      %p57 = por %p55, %p56
      %p59 = scmp.ne.s32.totalorder %s42, %s58
      %p60 = scmp.eq.s32.totalorder %s20, 0
      %p61 = por %p59, %p60
      %s63 = sadd.s32 %s62, 1
      %p66 = scmp.eq.s32.totalorder %s14, 2
      %p67 = scmp.ne.s32.totalorder %s62, %s64
      %p68 = scmp.eq.s32.totalorder %s14, 0
      %p69 = por %p67, %p68
      %p70 = scmp.ne.s32.totalorder %s62, %s64
      %p71 = scmp.eq.s32.totalorder %s19, 2
      %p72 = por %p70, %p71
      %p73 = scmp.ne.s32.totalorder %s64, %s65
      %p74 = scmp.eq.s32.totalorder %s19, 0
      %p75 = por %p73, %p74
      %p76 = scmp.ne.s32.totalorder %s64, %s65
      %p77 = scmp.eq.s32.totalorder %s20, 2
      %p78 = por %p76, %p77
      %p80 = scmp.ne.s32.totalorder %s65, %s79
      %p81 = scmp.eq.s32.totalorder %s20, 0
      %p82 = por %p80, %p81
      %s84 = sadd.s32 %s83, 1
      %p87 = scmp.eq.s32.totalorder %s14, 2
      %p88 = scmp.ne.s32.totalorder %s83, %s85
      %p89 = scmp.eq.s32.totalorder %s14, 0
      %p90 = por %p88, %p89
      %p91 = scmp.ne.s32.totalorder %s83, %s85
      %p92 = scmp.eq.s32.totalorder %s19, 2
      %p93 = por %p91, %p92
      %p94 = scmp.ne.s32.totalorder %s85, %s86
      %p95 = scmp.eq.s32.totalorder %s19, 0
      %p96 = por %p94, %p95
      %p97 = scmp.ne.s32.totalorder %s85, %s86
      %p98 = scmp.eq.s32.totalorder %s20, 2
      %p99 = por %p97, %p98
      %p101 = scmp.ne.s32.totalorder %s86, %s100
      %p102 = scmp.eq.s32.totalorder %s20, 0
      %p103 = por %p101, %p102
      %s105 = sadd.s32 %s104, 1
      %p108 = scmp.eq.s32.totalorder %s14, 2
      %p109 = scmp.ne.s32.totalorder %s104, %s106
      %p110 = scmp.eq.s32.totalorder %s14, 0
      %p111 = por %p109, %p110
      %p112 = scmp.ne.s32.totalorder %s104, %s106
      %p113 = scmp.eq.s32.totalorder %s19, 2
      %p114 = por %p112, %p113
      %p115 = scmp.ne.s32.totalorder %s106, %s107
      %p116 = scmp.eq.s32.totalorder %s19, 0
      %p117 = por %p115, %p116
      %p118 = scmp.ne.s32.totalorder %s106, %s107
      %p119 = scmp.eq.s32.totalorder %s20, 2
      %p120 = por %p118, %p119
      %p122 = scmp.ne.s32.totalorder %s107, %s121
      %p123 = scmp.eq.s32.totalorder %s20, 0
      %p124 = por %p122, %p123
      %s125 = ssub.s32 %s21, %s33
      %p126 = scmp.eq.s32.totalorder %s125, 0
      %s128 = sadd.s32 %s127, 1
      %s129 = scalar_select %p126, %s127, %s128
      %p132 = pneg %p126
      %p133 = scmp.eq.s32.totalorder %s14, 2
      %p134 = por %p132, %p133
      %p135 = scmp.ne.s32.totalorder %s127, %s130
      %p136 = scmp.eq.s32.totalorder %s14, 0
      %p137 = por %p135, %p136
      %p138 = scmp.ne.s32.totalorder %s127, %s130
      %p139 = scmp.eq.s32.totalorder %s19, 2
      %p140 = por %p138, %p139
      %p141 = scmp.ne.s32.totalorder %s130, %s131
      %p142 = scmp.eq.s32.totalorder %s19, 0
      %p143 = por %p141, %p142
      %p144 = scmp.ne.s32.totalorder %s130, %s131
      %p145 = scmp.eq.s32.totalorder %s20, 2
      %p146 = por %p144, %p145
      %p148 = scmp.ne.s32.totalorder %s131, %s147
      %p149 = scmp.eq.s32.totalorder %s20, 0
      %p150 = por %p148, %p149
      %p151 = scmp.le.s32.totalorder 1, %s14
      %p152 = scmp.lt.s32.totalorder %s14, 4
      %p153 = pnand %p151, %p152
      %p154 = pneg %p153
      // Predicated region
      $region9: #{tpu_custom_call.1} parent=5 // pred_check
        _
      $region10: #{tpu_custom_call.1} parent=5 // pred_check_branch
        %156 = sbr.rel (%p153) target = $region12
      $region11: #{tpu_custom_call.1} parent=5 // pred_region
        %s157 = ssub.s32 %s14, 1
        // Predicated region
        $region13: #{tpu_custom_call.1} parent=11 // pred_check
          %p158 = pneg %p75
        $region14: #{tpu_custom_call.1} parent=11 // pred_check_branch
          %160 = sbr.rel (%p158) target = $region16
        $region15: #{tpu_custom_call.1} parent=11 // pred_region
          %s162 = ssub.s32 2048, 2048
          %163 = vsyncadd [#allocation5], %s162
          %s164 = sshll.u32 [#allocation4], 4
          %s165 = int_to_ptr.vmem [resolvable:$true] %s164
          %170 = dma.hbm_to_vmem [thread:$0]  %s1, 2048, %s165, [#allocation5], 128, 128, 8
        $region16: #{tpu_custom_call.1} parent=11 // pred_fallthru
          _
        // Predicated region
        $region17: #{tpu_custom_call.1} parent=11 // pred_check
          %p171 = pneg %p96
        $region18: #{tpu_custom_call.1} parent=11 // pred_check_branch
          %173 = sbr.rel (%p171) target = $region20
        $region19: #{tpu_custom_call.1} parent=11 // pred_region
          _
        $region20: #{tpu_custom_call.1} parent=11 // pred_fallthru
          _
        // Predicated region
        $region21: #{tpu_custom_call.1} parent=11 // pred_check
          %p174 = pneg %p117
        $region22: #{tpu_custom_call.1} parent=11 // pred_check_branch
          %176 = sbr.rel (%p174) target = $region24
        $region23: #{tpu_custom_call.1} parent=11 // pred_region
          _
        $region24: #{tpu_custom_call.1} parent=11 // pred_fallthru
          _
      $region12: #{tpu_custom_call.1} parent=5 // pred_fallthru
        _
      %p177 = scmp.lt.s32.totalorder %s14, 3
      // Predicated region
      $region25: #{tpu_custom_call.1} parent=5 // pred_check
        %p178 = pneg %p177
      $region26: #{tpu_custom_call.1} parent=5 // pred_check_branch
        %180 = sbr.rel (%p178) target = $region28
      $region27: #{tpu_custom_call.1} parent=5 // pred_region
        // Predicated region
        $region29: #{tpu_custom_call.1} parent=27 // pred_check
          %p181 = pneg %p48
        $region30: #{tpu_custom_call.1} parent=27 // pred_check_branch
          %183 = sbr.rel (%p181) target = $region32
        $region31: #{tpu_custom_call.1} parent=27 // pred_region
          %s184 = sand.u32 %s38, 1
          %s185 = scalar_lea.sflag [#allocation3], %s184
          %s186 = sand.u32 %s38, 1
          %s187 = smul.addr %s186, 64
          %s188 = scalar_lea.vmem [#allocation2], %s187
          %s189 = smul.u32 8, %s22
          %s191 = ssub.s32 1024, 1024
          %192 = vsyncadd %s185, %s191
          %s193 = smul.addr %s21, 8
          %s194 = sadd.s32 %s189, %s193
          %s195 = smul.addr %s194, 128
          %s196 = scalar_lea.hbm %s0, %s195
          %s197 = sshll.u32 %s188, 4
          %s198 = int_to_ptr.vmem [resolvable:$true] %s197
          %203 = dma.hbm_to_vmem [thread:$0]  %s196, 1024, %s198, %s185, 128, 128, 8
        $region32: #{tpu_custom_call.1} parent=27 // pred_fallthru
          _
      $region28: #{tpu_custom_call.1} parent=5 // pred_fallthru
        _
      %p204 = scmp.le.s32.totalorder 1, %s14
      %p205 = scmp.lt.s32.totalorder %s14, 4
      %p206 = pnand %p204, %p205
      %p207 = pneg %p206
      // Predicated region
      $region33: #{tpu_custom_call.1} parent=5 // pred_check
        _
      $region34: #{tpu_custom_call.1} parent=5 // pred_check_branch
        %209 = sbr.rel (%p206) target = $region36
      $region35: #{tpu_custom_call.1} parent=5 // pred_region
        %s210 = ssub.s32 %s14, 1
        %s211 = sand.u32 %s41, 1
        %s212 = scalar_lea.sflag [#allocation3], %s211
        %s213 = sand.u32 %s41, 1
        %s214 = smul.addr %s213, 64
        %s215 = scalar_lea.vmem [#allocation2], %s214
        // Predicated region
        $region37: #{tpu_custom_call.1} parent=35 // pred_check
          %p216 = pneg %p54
        $region38: #{tpu_custom_call.1} parent=35 // pred_check_branch
          %218 = sbr.rel (%p216) target = $region40
        $region39: #{tpu_custom_call.1} parent=35 // pred_region
          %219 = dma.done %s212, 1024
        $region40: #{tpu_custom_call.1} parent=35 // pred_fallthru
          _
        // Predicated region
        $region41: #{tpu_custom_call.1} parent=35 // pred_check
          %p220 = pneg %p75
        $region42: #{tpu_custom_call.1} parent=35 // pred_check_branch
          %222 = sbr.rel (%p220) target = $region44
        $region43: #{tpu_custom_call.1} parent=35 // pred_region
          %223 = dma.done [#allocation5], 2048
        $region44: #{tpu_custom_call.1} parent=35 // pred_fallthru
          _
        %s224 = sand.u32 %s41, 1
        %s225 = scalar_lea.sflag [#allocation3], %s224
        %s226 = sand.u32 %s41, 1
        %s227 = smul.addr %s226, 64
        %s228 = scalar_lea.vmem [#allocation2], %s227
        %p229 = pneg %p54
        %p230 = pneg %p51
        %p231 = pneg %p75
        %p232 = pneg %p72
        %p233 = pneg %p96
        %p234 = pneg %p93
        %p235 = pneg %p117
        %p236 = pneg %p114
        %p237 = pneg %p143
        %p238 = pneg %p140
        %p239 = scmp.lt.s32.totalorder %s23, 2
        %s240 = scalar_select %p239, %s23, 2
        %s241 = scalar_lea.vmem %s4, %s240
        %s242 = smul.u32 8, %s24
        %p243 = scmp.lt.s32.totalorder %s23, 2
        %s244 = scalar_select %p243, %s23, 2
        %s245 = scalar_lea.vmem %s4, %s244
        %p246 = scmp.eq.s32.totalorder %s24, 0
        // Predicated region
        $region45: #{tpu_custom_call.1} parent=35 // pred_check
          %p247 = pneg %p246
        $region46: #{tpu_custom_call.1} parent=35 // pred_check_branch
          %249 = sbr.rel (%p247) target = $region48
        $region47: #{tpu_custom_call.1} parent=35 // pred_region
          %vm250 = vcmask 0
          %251 = vst.msk [vmem:[%s245] sm:$0x1] %vm250, 0.0
        $region48: #{tpu_custom_call.1} parent=35 // pred_fallthru
          _
        %v252 = vld [vmem:[%s215] sm:$0xff]
        %v253 = vld [vmem:[%s215 + $0x8] sm:$0xff]
        %v254 = vld [vmem:[%s215 + $0x10] sm:$0xff]
        %v255 = vld [vmem:[%s215 + $0x18] sm:$0xff]
        %v256 = vld [vmem:[%s215 + $0x20] sm:$0xff]
        %v257 = vld [vmem:[%s215 + $0x28] sm:$0xff]
        %v258 = vld [vmem:[%s215 + $0x30] sm:$0xff]
        %v259 = vld [vmem:[%s215 + $0x38] sm:$0xff]
        %v260 = vld [vmem:[#allocation4] sm:$0xff]
        %v261 = vld [vmem:[#allocation4 + $0x8] sm:$0xff]
        %v262 = vld [vmem:[#allocation4 + $0x10] sm:$0xff]
        %v263 = vld [vmem:[#allocation4 + $0x18] sm:$0xff]
        %v264 = vld [vmem:[#allocation4 + $0x20] sm:$0xff]
        %v265 = vld [vmem:[#allocation4 + $0x28] sm:$0xff]
        %v266 = vld [vmem:[#allocation4 + $0x30] sm:$0xff]
        %v267 = vld [vmem:[#allocation4 + $0x38] sm:$0xff]
        %v268 = vld [vmem:[#allocation4 + $0x40] sm:$0xff]
        %v269 = vld [vmem:[#allocation4 + $0x48] sm:$0xff]
        %v270 = vld [vmem:[#allocation4 + $0x50] sm:$0xff]
        %v271 = vld [vmem:[#allocation4 + $0x58] sm:$0xff]
        %v272 = vld [vmem:[#allocation4 + $0x60] sm:$0xff]
        %v273 = vld [vmem:[#allocation4 + $0x68] sm:$0xff]
        %v274 = vld [vmem:[#allocation4 + $0x70] sm:$0xff]
        %v275 = vld [vmem:[#allocation4 + $0x78] sm:$0xff]
        %v276 = vld [vmem:[%s2] sm:$0x1]
        %v278 = vlaneseq
        %v279 = vshrl.u32 %v278, 7
        %v280 = vsub.s32 0, %v279
        %v281 = vrot.slane %v276, %v280
        %283 = vmatprep.subr.mxu0 0.0
        %284 = vmatpush1.msra.mxu0 %v260
        %285 = vmatprep.subr.mxu0 0.0
        %286 = vmatpush1.msra.mxu0 %v261
        %287 = vmatprep.subr.mxu0 0.0
        %288 = vmatpush1.msra.mxu0 %v262
        %289 = vmatprep.subr.mxu0 0.0
        %290 = vmatpush1.msra.mxu0 %v263
        %291 = vmatprep.subr.mxu0 0.0
        %292 = vmatpush1.msra.mxu0 %v264
        %293 = vmatprep.subr.mxu0 0.0
        %294 = vmatpush1.msra.mxu0 %v265
        %295 = vmatprep.subr.mxu0 0.0
        %296 = vmatpush1.msra.mxu0 %v266
        %297 = vmatprep.subr.mxu0 0.0
        %298 = vmatpush1.msra.mxu0 %v267
        %299 = vmatprep.subr.mxu0 0.0
        %300 = vmatpush1.msra.mxu0 %v268
        %301 = vmatprep.subr.mxu0 0.0
        %302 = vmatpush1.msra.mxu0 %v269
        %303 = vmatprep.subr.mxu0 0.0
        %304 = vmatpush1.msra.mxu0 %v270
        %305 = vmatprep.subr.mxu0 0.0
        %306 = vmatpush1.msra.mxu0 %v271
        %307 = vmatprep.subr.mxu0 0.0
        %308 = vmatpush1.msra.mxu0 %v272
        %309 = vmatprep.subr.mxu0 0.0
        %310 = vmatpush1.msra.mxu0 %v273
        %311 = vmatprep.subr.mxu0 0.0
        %312 = vmatpush1.msra.mxu0 %v274
        %313 = vmatprep.subr.mxu0 0.0
        %314 = vmatpush1.msra.mxu0 %v275
        %315 = vmatprep.subr.mxu0 0.0
        %316 = vmatpush1.msra.mxu0 0.0
        %317 = vmatprep.subr.mxu0 0.0
        %318 = vmatpush1.msra.mxu0 0.0
        %319 = vmatprep.subr.mxu0 0.0
        %320 = vmatpush1.msra.mxu0 0.0
        %321 = vmatprep.subr.mxu0 0.0
        %322 = vmatpush1.msra.mxu0 0.0
        %323 = vmatprep.subr.mxu0 0.0
        %324 = vmatpush1.msra.mxu0 0.0
        %325 = vmatprep.subr.mxu0 0.0
        %326 = vmatpush1.msra.mxu0 0.0
        %327 = vmatprep.subr.mxu0 0.0
        %328 = vmatpush1.msra.mxu0 0.0
        %329 = vmatprep.subr.mxu0 0.0
        %330 = vmatpush1.msra.mxu0 0.0
        %331 = vmatprep.subr.mxu0 0.0
        %332 = vmatpush1.msra.mxu0 0.0
        %333 = vmatprep.subr.mxu0 0.0
        %334 = vmatpush1.msra.mxu0 0.0
        %335 = vmatprep.subr.mxu0 0.0
        %336 = vmatpush1.msra.mxu0 0.0
        %337 = vmatprep.subr.mxu0 0.0
        %338 = vmatpush1.msra.mxu0 0.0
        %339 = vmatprep.subr.mxu0 0.0
        %340 = vmatpush1.msra.mxu0 0.0
        %341 = vmatprep.subr.mxu0 0.0
        %342 = vmatpush1.msra.mxu0 0.0
        %343 = vmatprep.subr.mxu0 0.0
        %344 = vmatpush1.msra.mxu0 0.0
        %345 = vmatprep.subr.mxu0 0.0
        %346 = vmatpush1.msra.mxu0 0.0
        %347 = vmatprep.mubr.f32.mxu0 0.0
        %348 = vmatmul.mubr.f32.gmra.mrb[0].mxu0 %v252
        %v349 = vpop.f32.mrb[0].mxu0
        %v350 = vadd.f32 %v281, %v349
        %v351 = vpop.f32.mrb[0].mxu0
        %352 = vmatprep.mubr.f32.mxu0 0.0
        %353 = vmatmul.mubr.f32.gmra.mrb[0].mxu0 %v253
        %v354 = vpop.f32.mrb[0].mxu0
        %v355 = vadd.f32 %v281, %v354
        %v356 = vpop.f32.mrb[0].mxu0
        %357 = vmatprep.mubr.f32.mxu0 0.0
        %358 = vmatmul.mubr.f32.gmra.mrb[0].mxu0 %v254
        %v359 = vpop.f32.mrb[0].mxu0
        %v360 = vadd.f32 %v281, %v359
        %v361 = vpop.f32.mrb[0].mxu0
        %362 = vmatprep.mubr.f32.mxu0 0.0
        %363 = vmatmul.mubr.f32.gmra.mrb[0].mxu0 %v255
        %v364 = vpop.f32.mrb[0].mxu0
        %v365 = vadd.f32 %v281, %v364
        %v366 = vpop.f32.mrb[0].mxu0
        %367 = vmatprep.mubr.f32.mxu0 0.0
        %368 = vmatmul.mubr.f32.gmra.mrb[0].mxu0 %v256
        %v369 = vpop.f32.mrb[0].mxu0
        %v370 = vadd.f32 %v281, %v369
        %v371 = vpop.f32.mrb[0].mxu0
        %372 = vmatprep.mubr.f32.mxu0 0.0
        %373 = vmatmul.mubr.f32.gmra.mrb[0].mxu0 %v257
        %v374 = vpop.f32.mrb[0].mxu0
        %v375 = vadd.f32 %v281, %v374
        %v376 = vpop.f32.mrb[0].mxu0
        %377 = vmatprep.mubr.f32.mxu0 0.0
        %378 = vmatmul.mubr.f32.gmra.mrb[0].mxu0 %v258
        %v379 = vpop.f32.mrb[0].mxu0
        %v380 = vadd.f32 %v281, %v379
        %v381 = vpop.f32.mrb[0].mxu0
        %382 = vmatprep.mubr.f32.mxu0 0.0
        %383 = vmatmul.mubr.f32.gmra.mrb[0].mxu0 %v259
        %v384 = vpop.f32.mrb[0].mxu0
        %v385 = vadd.f32 %v281, %v384
        %v386 = vpop.f32.mrb[0].mxu0
        %387 = vdwg.mxu0
        %v388 = vtanh.pop %v350
        %v389 = vtanh.pop %v355
        %v390 = vtanh.pop %v360
        %v391 = vtanh.pop %v365
        %v392 = vtanh.pop %v370
        %v393 = vtanh.pop %v375
        %v394 = vtanh.pop %v380
        %v395 = vtanh.pop %v385
        %v396 = vadd.f32 %v388, %v389
        %v397 = vadd.f32 %v396, %v390
        %v398 = vadd.f32 %v397, %v391
        %v399 = vadd.f32 %v398, %v392
        %v400 = vadd.f32 %v399, %v393
        %v401 = vadd.f32 %v400, %v394
        %v402 = vadd.f32 %v401, %v395
        %v403 = vrot.slane %v402, 4
        %v404 = vadd.f32 %v402, %v403
        %v405 = vrot.slane %v404, 2
        %v406 = vadd.f32 %v404, %v405
        %v407 = vrot.slane %v406, 1
        %v408 = vadd.f32 %v406, %v407
        %v409 = vld [vmem:[%s245] sm:$0x1]
        %v410 = vld [vmem:[%s3] sm:$0x1]
        %v411 = vmul.f32 %v408, %v410
        %vm412 = vcmask 1040384
        %v413 = vsel %vm412, %v411, 0.0
        %414 = vadd.xlane.f32.xlu0 %v413
        %v415 = vpop.xlane.xlu0 %414
        %v416 = vrot.slane %v415, 4
        %v417 = vadd.f32 %v415, %v416
        %v418 = vrot.slane %v417, 2
        %v419 = vadd.f32 %v417, %v418
        %v420 = vrot.slane %v419, 1
        %v421 = vadd.f32 %v419, %v420
        %s422 = vtos %v421
        %v423 = vstv %s422
        %v424 = vadd.f32 %v409, %v423
        %vm425 = vcmask 0
        %426 = vst.msk [vmem:[%s245] sm:$0x1] %vm425, %v424
        %p427 = scmp.lt.s32.totalorder %s23, 2
        %s428 = scalar_select %p427, %s23, 2
        %s429 = scalar_lea.vmem %s4, %s428
        // Predicated region
        $region49: #{tpu_custom_call.1} parent=35 // pred_check
          %p430 = pneg %p140
        $region50: #{tpu_custom_call.1} parent=35 // pred_check_branch
          %432 = sbr.rel (%p430) target = $region52
        $region51: #{tpu_custom_call.1} parent=35 // pred_region
          _
        $region52: #{tpu_custom_call.1} parent=35 // pred_fallthru
          _
      $region36: #{tpu_custom_call.1} parent=5 // pred_fallthru
        _
      %p433 = scmp.le.s32.totalorder 2, %s14
      // Predicated region
      $region53: #{tpu_custom_call.1} parent=5 // pred_check
        %p434 = pneg %p433
      $region54: #{tpu_custom_call.1} parent=5 // pred_check_branch
        %436 = sbr.rel (%p434) target = $region56
      $region55: #{tpu_custom_call.1} parent=5 // pred_region
        %s437 = ssub.s32 %s14, 2
        // Predicated region
        $region57: #{tpu_custom_call.1} parent=55 // pred_check
          %p438 = pneg %p146
        $region58: #{tpu_custom_call.1} parent=55 // pred_check_branch
          %440 = sbr.rel (%p438) target = $region60
        $region59: #{tpu_custom_call.1} parent=55 // pred_region
          %p441 = scmp.lt.s32.totalorder %s25, 2
          %s442 = scalar_select %p441, %s25, 2
          %s443 = scalar_lea.vmem %s4, %s442
        $region60: #{tpu_custom_call.1} parent=55 // pred_fallthru
          _
      $region56: #{tpu_custom_call.1} parent=5 // pred_fallthru
        _
    $region6: #{tpu_custom_call.1} parent=1 // loop_footer
      %s18 = sadd.s32 1, %s14
    $region7: #{tpu_custom_call.1} parent=1 // loop_footer_branch
      %13 = sbr.rel target = $region3
    $region8: #{tpu_custom_call.1} parent=1 // loop_exit
      _
    %444 = vsyncpa [#allocation3], 1
    %s445 = scalar_lea.sflag [#allocation3], 1
    %446 = vsyncpa %s445, 1
    %447 = vsyncpa [#allocation5], 1

</llo_original>
